<compile_context>
chip_gen: v7x
topology: tpu7x:2x2x1
jax: 0.10.0
libtpu: 0.0.40
codegen_flags: <defaults>
</compile_context>

<pallas_src>
import jax
import jax.numpy as jnp
from jax.experimental import pallas as pl
from jax.experimental.pallas import tpu as pltpu

N_NODES = 8
N_EDGES = 16
FEAT_DIM = 32      # encoder-internal node embedding dim (== HIDDEN_DIM)
HIDDEN_DIM = 32
PROJ_DIM = 32
N_GRAPHS = 3       # (z, z1, z2)


# ----------------------------- Pallas kernel -------------------------------

def _fused_encoder_kernel(adj_ref, emb_ref, w_ref, b_ref, o_ref):
    """Fused 3-graph 2-layer GCN + projection head.

    adj_ref : [3N, 3N] block-diagonal, already-normalized A_hat (one per graph)
    emb_ref : [N, F]   learned node embeddings (shared across the 3 graphs)
    w_ref   : [3F, H]  sublane-stacked [W1 ; W2 ; fc1_W^T]
    b_ref   : [3, H]   sublane-stacked [b1 ; b2 ; fc1_b]
    o_ref   : [N, 4H]  lane-dense output slab [Z | Z1 | Z2 | p]

        H_g = relu(A_hat_g @ (X @ W1) + b1)    (X @ W1 computed once, tiled 3x)
        Z_g = A_hat_g @ (H_g @ W2) + b2        (both props = ONE block-diag dot)
        p   = ELU(Z_0 @ fc1_W^T + fc1_b)
    """
    n = emb_ref.shape[0]
    f = emb_ref.shape[1]

    # Static, sublane-tile-aligned slices of the packed weight slab (free views).
    w1 = w_ref[0 * f:1 * f, :]
    w2 = w_ref[1 * f:2 * f, :]
    fc1_wt = w_ref[2 * f:3 * f, :]

    b_all = b_ref[...]                       # [3, H] -> one vreg-sized load
    b1 = b_all[0:1, :]
    b2 = b_all[1:2, :]
    fc1_b = b_all[2:3, :]

    a = adj_ref[...]                         # [3N, 3N] block-diag A_hat

    # --- layer 1: shared feature transform, single block-diag propagation ---
    h0 = jnp.dot(emb_ref[...], w1, preferred_element_type=jnp.float32)   # [N,H]
    h0_3 = jnp.concatenate([h0, h0, h0], axis=0)                          # [3N,H]
    h1 = jnp.dot(a, h0_3, preferred_element_type=jnp.float32) + b1
    h1 = jnp.maximum(h1, 0.0)                                             # ReLU

    # --- layer 2: stacked feature transform, single block-diag propagation --
    h2 = jnp.dot(h1, w2, preferred_element_type=jnp.float32)              # [3N,H]
    z_all = jnp.dot(a, h2, preferred_element_type=jnp.float32) + b2       # [3N,H]

    # --- projection head on z (graph 0): ELU(fc1(z)) ------------------------
    z = z_all[0 * n:1 * n, :]
    p = jnp.dot(z, fc1_wt, preferred_element_type=jnp.float32) + fc1_b
    # ELU(alpha=1); clamp exp arg so the unselected branch stays finite.
    p = jnp.where(p > 0.0, p, jnp.exp(jnp.minimum(p, 0.0)) - 1.0)

    # Single lane-dense [N, 4H] = [8, 128] store (full-width, unmasked vst).
    o_ref[...] = jnp.concatenate(
        [z, z_all[1 * n:2 * n, :], z_all[2 * n:3 * n, :], p], axis=-1)


# ------------------------------ fused wrapper -------------------------------

def _normalized_adjacency(edge_index, edge_weight, n):
    """Edge-space gcn_norm (matches torch_geometric GCNConv):
       deg[i] = sum_{e: dst==i} w_e + 1 (self-loop), dinv = deg^{-1/2},
       A_hat[dst, src] += dinv[src] * w * dinv[dst],  A_hat[i, i] += dinv[i]^2.
       Duplicate (src, dst) pairs accumulate, as in PyG scatter-add aggregation.
    """
    src, dst = edge_index[0], edge_index[1]
    deg = jnp.zeros((n,), jnp.float32).at[dst].add(edge_weight) + 1.0
    dinv = jax.lax.rsqrt(deg)
    norm = dinv[src] * edge_weight * dinv[dst]
    a = jnp.zeros((n, n), jnp.float32).at[dst, src].add(norm)
    return a + jnp.diag(dinv * dinv)


def _fused_forward_project(params, edge_index, edge_weight):
    n, h = N_NODES, HIDDEN_DIM
    e = edge_weight.shape[0]

    # Augmentors (deterministic):
    #   aug1: edge dropping  -> keep every other edge (weight 0 == removed,
    #         numerically identical to deleting the edge under gcn_norm).
    #   aug2: feature masking -> masks x only; graph is untouched.  The encoder
    #         ignores x (as in the reference), so z2 uses the original graph.
    keep = (jnp.arange(e) % 2 == 0).astype(jnp.float32)
    ew_stack = (edge_weight,            # z  : original graph
                edge_weight * keep,     # z1 : aug1 (edge dropping)
                edge_weight)            # z2 : aug2 (feature masking)

    # O(E) normalization + dense scatter build (data-dependent -> stays in XLA,
    # but under the same jit as the pallas_call => one device dispatch).
    a0, a1, a2 = (_normalized_adjacency(edge_index, ew, n) for ew in ew_stack)
    zero = jnp.zeros((n, n), jnp.float32)
    adj_bd = jnp.block([[a0, zero, zero],
                        [zero, a1, zero],
                        [zero, zero, a2]])          # [3N, 3N] block-diag A_hat

    out = pl.pallas_call(
        _fused_encoder_kernel,
        out_shape=jax.ShapeDtypeStruct((n, 4 * h), jnp.float32),
        # Whole arrays staged into VMEM once (a few KiB total); staging pinned.
        in_specs=[pl.BlockSpec(memory_space=pltpu.MemorySpace.VMEM)] * 4,
        out_specs=pl.BlockSpec(memory_space=pltpu.MemorySpace.VMEM),
        compiler_params=pltpu.CompilerParams(vmem_limit_bytes=8 * 1024 * 1024),
    )(adj_bd, params["emb"], params["w_slab"], params["b_slab"])

    z = out[:, 0 * h:1 * h]
    z1 = out[:, 1 * h:2 * h]
    z2 = out[:, 2 * h:3 * h]
    p = out[:, 3 * h:4 * h]
    return z, z1, z2, p


_fused_forward_project_jit = jax.jit(_fused_forward_project)


# ------------------------ reference-shaped public API ------------------------

def encoder_forward(params, x, edge_index, edge_weight=None):
    """Encoder.forward: returns (z, z1, z2).  `x` only feeds the augmentors,
    whose augmented features are unused by the encoder (matching the reference,
    which calls self.encoder(edge_index, edge_weight))."""
    del x
    if edge_weight is None:
        edge_weight = jnp.ones((edge_index.shape[1],), jnp.float32)
    z, z1, z2, _ = _fused_forward_project_jit(params, edge_index, edge_weight)
    return z, z1, z2


def forward_and_project(params, x, edge_index, edge_weight=None):
    """Fused forward + project(z): returns (z, z1, z2, p) from ONE kernel call."""
    del x
    if edge_weight is None:
        edge_weight = jnp.ones((edge_index.shape[1],), jnp.float32)
    return _fused_forward_project_jit(params, edge_index, edge_weight)


# --------------------------- pure-JAX reference ------------------------------

def _reference_forward_project(params, edge_index, edge_weight):
    """Un-fused plain-JAX version of the same math (correctness oracle)."""
    n = N_NODES
    e = edge_weight.shape[0]
    keep = (jnp.arange(e) % 2 == 0).astype(jnp.float32)

    def encode(ew):
        a = _normalized_adjacency(edge_index, ew, n)
        h1 = jnp.maximum(a @ (params["emb"] @ params["w1"]) + params["b1"], 0.0)
        return a @ (h1 @ params["w2"]) + params["b2"]

    z = encode(edge_weight)
    z1 = encode(edge_weight * keep)
    z2 = encode(edge_weight)
    p = z @ params["fc1_w"].T + params["fc1_b"]
    p = jnp.where(p > 0.0, p, jnp.exp(jnp.minimum(p, 0.0)) - 1.0)
    return z, z1, z2, p


# --------------------------------- params -----------------------------------

def init_params(key):
    ks = jax.random.split(key, 8)

    def glorot(k, shape):
        fan_in, fan_out = shape[0], shape[1]
        s = jnp.sqrt(6.0 / (fan_in + fan_out))
        return jax.random.uniform(k, shape, jnp.float32, -s, s)

    assert FEAT_DIM == HIDDEN_DIM, "weight slab packing assumes F == H"

    w1 = glorot(ks[1], (FEAT_DIM, HIDDEN_DIM))
    w2 = glorot(ks[2], (HIDDEN_DIM, HIDDEN_DIM))
    b1 = jnp.zeros((1, HIDDEN_DIM), jnp.float32)
    b2 = jnp.zeros((1, HIDDEN_DIM), jnp.float32)
    fc1_w = glorot(ks[3], (HIDDEN_DIM, HIDDEN_DIM))   # torch layout (out, in)
    fc1_b = jnp.zeros((1, HIDDEN_DIM), jnp.float32)

    params = {
        # GCN encoder (owns its node embeddings)
        "emb": glorot(ks[0], (N_NODES, FEAT_DIM)),
        "w1": w1, "b1": b1, "w2": w2, "b2": b2,
        # fc1 = Linear(hidden_dim, hidden_dim)
        "fc1_w": fc1_w, "fc1_b": fc1_b,
        # Packed kernel operands: one weight slab, one bias slab (fewer DMAs).
        "w_slab": jnp.concatenate([w1, w2, jnp.transpose(fc1_w)], axis=0),  # [3F,H]
        "b_slab": jnp.concatenate([b1, b2, fc1_b], axis=0),                 # [3,H]
        # fc2 = Linear(proj_dim, hidden_dim) — defined in __init__ but never
        # used by forward() or project() in the reference; kept for parity.
        "fc2_w": glorot(ks[4], (HIDDEN_DIM, PROJ_DIM)),
        "fc2_b": jnp.zeros((1, HIDDEN_DIM), jnp.float32),
    }
    return params


if __name__ == "__main__":
    key = jax.random.PRNGKey(0)
    k_p, k_x, k_ei, k_ew = jax.random.split(key, 4)

    params = init_params(k_p)
    x = jax.random.normal(k_x, (N_NODES, FEAT_DIM), jnp.float32)
    edge_index = jax.random.randint(k_ei, (2, N_EDGES), 0, N_NODES, jnp.int32)
    edge_weight = jax.random.uniform(k_ew, (N_EDGES,), jnp.float32, 0.1, 1.0)

    z, z1, z2, p = forward_and_project(params, x, edge_index, edge_weight)
    jax.block_until_ready((z, z1, z2, p))

    assert z.shape == (N_NODES, HIDDEN_DIM)
    assert z1.shape == (N_NODES, HIDDEN_DIM)
    assert z2.shape == (N_NODES, HIDDEN_DIM)
    assert p.shape == (N_NODES, HIDDEN_DIM)
    assert all(bool(jnp.all(jnp.isfinite(t))) for t in (z, z1, z2, p))

    # Correctness check against the plain-JAX oracle.
    zr, z1r, z2r, pr = _reference_forward_project(params, edge_index, edge_weight)
    for got, ref in ((z, zr), (z1, z1r), (z2, z2r), (p, pr)):
        assert bool(jnp.max(jnp.abs(got - ref)) < 1e-4)

    print("KERNEL_OK")
</pallas_src>

<mosaic_0001>
module attributes {stable_mosaic.version = 11 : i64} {
  func.func private @main(%arg0: i32) attributes {dimension_semantics = [#tpu.dimension_semantics<core_parallel>], iteration_bounds = array<i64: 2>, tpu.core_type = #tpu.core_type<sc_scalar_subcore>, window_params = []} {
    return
  }
}

module attributes {stable_mosaic.version = 11 : i64} {
  func.func private @main(%arg0: i32) attributes {dimension_semantics = [#tpu.dimension_semantics<core_parallel>], iteration_bounds = array<i64: 2>, tpu.core_type = #tpu.core_type<sc_scalar_subcore>, window_params = []} {
    return
  }
}

module attributes {stable_mosaic.version = 11 : i64} {
  func.func @_fused_encoder_kernel(%arg0: memref<24x24xf32, #tpu.memory_space<vmem>>, %arg1: memref<8x32xf32, #tpu.memory_space<vmem>>, %arg2: memref<96x32xf32, #tpu.memory_space<vmem>>, %arg3: memref<3x32xf32, #tpu.memory_space<vmem>>, %arg4: memref<8x128xf32, #tpu.memory_space<vmem>>) attributes {dimension_semantics = [], scalar_prefetch = 0 : i64, scratch_operands = 0 : i64, tpu.core_type = #tpu.core_type<tc>} {
    %c0 = arith.constant 0 : index
    %c0_0 = arith.constant 0 : index
    %0 = vector.load %arg2[%c0, %c0_0] : memref<96x32xf32, #tpu.memory_space<vmem>>, vector<32x32xf32>
    %c32 = arith.constant 32 : index
    %c0_1 = arith.constant 0 : index
    %1 = vector.load %arg2[%c32, %c0_1] : memref<96x32xf32, #tpu.memory_space<vmem>>, vector<32x32xf32>
    %c64 = arith.constant 64 : index
    %c0_2 = arith.constant 0 : index
    %2 = vector.load %arg2[%c64, %c0_2] : memref<96x32xf32, #tpu.memory_space<vmem>>, vector<32x32xf32>
    %c0_3 = arith.constant 0 : index
    %c0_4 = arith.constant 0 : index
    %3 = vector.load %arg3[%c0_3, %c0_4] : memref<3x32xf32, #tpu.memory_space<vmem>>, vector<3x32xf32>
    %4 = vector.extract_strided_slice %3 {offsets = [0, 0], sizes = [1, 32], strides = [1, 1]} : vector<3x32xf32> to vector<1x32xf32>
    %5 = vector.extract_strided_slice %3 {offsets = [1, 0], sizes = [1, 32], strides = [1, 1]} : vector<3x32xf32> to vector<1x32xf32>
    %6 = vector.extract_strided_slice %3 {offsets = [2, 0], sizes = [1, 32], strides = [1, 1]} : vector<3x32xf32> to vector<1x32xf32>
    %c0_5 = arith.constant 0 : index
    %c0_6 = arith.constant 0 : index
    %7 = vector.load %arg0[%c0_5, %c0_6] : memref<24x24xf32, #tpu.memory_space<vmem>>, vector<24x24xf32>
    %c0_7 = arith.constant 0 : index
    %c0_8 = arith.constant 0 : index
    %8 = vector.load %arg1[%c0_7, %c0_8] : memref<8x32xf32, #tpu.memory_space<vmem>>, vector<8x32xf32>
    %cst = arith.constant dense<0.000000e+00> : vector<8x32xf32>
    %9 = tpu.matmul %8, %0, %cst {dimension_numbers = #tpu.dot_dimension_numbers<[1], [0], [0], [1], [0, 0, 1, 1], [], []>} : vector<8x32xf32>, vector<32x32xf32>, vector<8x32xf32> -> vector<8x32xf32>
    %10 = tpu.concatenate %9, %9, %9 in 0 : vector<8x32xf32>, vector<8x32xf32>, vector<8x32xf32> -> vector<24x32xf32>
    %cst_9 = arith.constant dense<0.000000e+00> : vector<24x32xf32>
    %11 = tpu.matmul %7, %10, %cst_9 {dimension_numbers = #tpu.dot_dimension_numbers<[1], [0], [0], [1], [0, 0, 1, 1], [], []>} : vector<24x24xf32>, vector<24x32xf32>, vector<24x32xf32> -> vector<24x32xf32>
    %12 = vector.broadcast %4 : vector<1x32xf32> to vector<24x32xf32>
    %13 = arith.addf %11, %12 : vector<24x32xf32>
    %cst_10 = arith.constant 0.000000e+00 : f32
    %14 = vector.broadcast %cst_10 : f32 to vector<24x32xf32>
    %15 = arith.maximumf %13, %14 : vector<24x32xf32>
    %cst_11 = arith.constant dense<0.000000e+00> : vector<24x32xf32>
    %16 = tpu.matmul %15, %1, %cst_11 {dimension_numbers = #tpu.dot_dimension_numbers<[1], [0], [0], [1], [0, 0, 1, 1], [], []>} : vector<24x32xf32>, vector<32x32xf32>, vector<24x32xf32> -> vector<24x32xf32>
    %cst_12 = arith.constant dense<0.000000e+00> : vector<24x32xf32>
    %17 = tpu.matmul %7, %16, %cst_12 {dimension_numbers = #tpu.dot_dimension_numbers<[1], [0], [0], [1], [0, 0, 1, 1], [], []>} : vector<24x24xf32>, vector<24x32xf32>, vector<24x32xf32> -> vector<24x32xf32>
    %18 = vector.broadcast %5 : vector<1x32xf32> to vector<24x32xf32>
    %19 = arith.addf %17, %18 : vector<24x32xf32>
    %20 = vector.extract_strided_slice %19 {offsets = [0, 0], sizes = [8, 32], strides = [1, 1]} : vector<24x32xf32> to vector<8x32xf32>
    %cst_13 = arith.constant dense<0.000000e+00> : vector<8x32xf32>
    %21 = tpu.matmul %20, %2, %cst_13 {dimension_numbers = #tpu.dot_dimension_numbers<[1], [0], [0], [1], [0, 0, 1, 1], [], []>} : vector<8x32xf32>, vector<32x32xf32>, vector<8x32xf32> -> vector<8x32xf32>
    %22 = vector.broadcast %6 : vector<1x32xf32> to vector<8x32xf32>
    %23 = arith.addf %21, %22 : vector<8x32xf32>
    %cst_14 = arith.constant 0.000000e+00 : f32
    %24 = vector.broadcast %cst_14 : f32 to vector<8x32xf32>
    %25 = arith.cmpf ogt, %23, %24 : vector<8x32xf32>
    %cst_15 = arith.constant 0.000000e+00 : f32
    %26 = vector.broadcast %cst_15 : f32 to vector<8x32xf32>
    %27 = arith.minimumf %23, %26 : vector<8x32xf32>
    %28 = math.exp %27 : vector<8x32xf32>
    %cst_16 = arith.constant 1.000000e+00 : f32
    %29 = vector.broadcast %cst_16 : f32 to vector<8x32xf32>
    %30 = arith.subf %28, %29 : vector<8x32xf32>
    %31 = arith.select %25, %23, %30 : vector<8x32xi1>, vector<8x32xf32>
    %32 = vector.extract_strided_slice %19 {offsets = [8, 0], sizes = [8, 32], strides = [1, 1]} : vector<24x32xf32> to vector<8x32xf32>
    %33 = vector.extract_strided_slice %19 {offsets = [16, 0], sizes = [8, 32], strides = [1, 1]} : vector<24x32xf32> to vector<8x32xf32>
    %34 = tpu.concatenate %20, %32, %33, %31 in 1 : vector<8x32xf32>, vector<8x32xf32>, vector<8x32xf32>, vector<8x32xf32> -> vector<8x128xf32>
    %c0_17 = arith.constant 0 : index
    %c0_18 = arith.constant 0 : index
    %35 = vector.load %arg4[%c0_17, %c0_18] : memref<8x128xf32, #tpu.memory_space<vmem>>, vector<8x128xf32>
    tpu.vector_store %arg4[%c0_17, %c0_18], %34 {strides = array<i32>} : memref<8x128xf32, #tpu.memory_space<vmem>>, vector<8x128xf32>,
    return
  }
}

</mosaic_0001>

<llo_original>
// kernel: _fused_forward_project.1
$region0: #{_fused_forward_project.1}
  #allocation0 [shape = 'u32[]', space=smem, size = 0x4, offset = 0x4, fixed_abs, tag = 'smem constant byte address 0x4 - core index']
  #allocation1 [shape = 'u32[144,128]{1,0:T(1,128)}', space=vmem, size = 0x12000, scoped, tag = 'internal scratch']
  %s0 = inlined_call_operand.vmem [shape: f32[24,24], index: 0, kind: input, shape index: {}]
  %s1 = inlined_call_operand.vmem [shape: f32[8,32], index: 1, kind: input, shape index: {}]
  %s2 = inlined_call_operand.vmem [shape: f32[96,32], index: 2, kind: input, shape index: {}]
  %s3 = inlined_call_operand.vmem [shape: f32[3,32], index: 3, kind: input, shape index: {}]
  %s4 = inlined_call_operand.vmem [shape: f32[8,128], index: 4, kind: output, shape index: {}]
  %s5 = sld [smem:[#allocation0]]
  $region26: #{_fused_forward_project.1} parent=0
    _
  %s7 = ssub.s32 1, %s5
  %s8 = scalar_select 0, %s7, %s5
  // Predicated region
  $region2: #{_fused_forward_project.1} parent=0 // pred_check
    _
  $region3: #{_fused_forward_project.1} parent=0 // pred_check_branch
    %10 = sbr.rel (0) target = $region5
  $region4: #{_fused_forward_project.1} parent=0 // pred_region
    _
  $region5: #{_fused_forward_project.1} parent=0 // pred_fallthru
    _
  // Predicated region
  $region6: #{_fused_forward_project.1} parent=0 // pred_check
    _
  $region7: #{_fused_forward_project.1} parent=0 // pred_check_branch
    %12 = sbr.rel (0) target = $region9
  $region8: #{_fused_forward_project.1} parent=0 // pred_region
    _
  $region9: #{_fused_forward_project.1} parent=0 // pred_fallthru
    _
  // Predicated region
  $region10: #{_fused_forward_project.1} parent=0 // pred_check
    _
  $region11: #{_fused_forward_project.1} parent=0 // pred_check_branch
    %14 = sbr.rel (0) target = $region13
  $region12: #{_fused_forward_project.1} parent=0 // pred_region
    _
  $region13: #{_fused_forward_project.1} parent=0 // pred_fallthru
    _
  // Predicated region
  $region14: #{_fused_forward_project.1} parent=0 // pred_check
    _
  $region15: #{_fused_forward_project.1} parent=0 // pred_check_branch
    %16 = sbr.rel (0) target = $region17
  $region16: #{_fused_forward_project.1} parent=0 // pred_region
    _
  $region17: #{_fused_forward_project.1} parent=0 // pred_fallthru
    _
  %v17 = vld [vmem:[%s2] sm:$0xff]
  %v18 = vld [vmem:[%s2 + $0x8] sm:$0xff]
  %v19 = vld [vmem:[%s2 + $0x10] sm:$0xff]
  %v20 = vld [vmem:[%s2 + $0x18] sm:$0xff]
  %v21 = vld [vmem:[%s2 + $0x20] sm:$0xff]
  %v22 = vld [vmem:[%s2 + $0x28] sm:$0xff]
  %v23 = vld [vmem:[%s2 + $0x30] sm:$0xff]
  %v24 = vld [vmem:[%s2 + $0x38] sm:$0xff]
  %v25 = vld [vmem:[%s2 + $0x40] sm:$0xff]
  %v26 = vld [vmem:[%s2 + $0x48] sm:$0xff]
  %v27 = vld [vmem:[%s2 + $0x50] sm:$0xff]
  %v28 = vld [vmem:[%s2 + $0x58] sm:$0xff]
  %v29 = vld [vmem:[%s3] sm:$0x7]
  %v30 = vld [vmem:[%s0] sm:$0xff]
  %v31 = vld [vmem:[%s0 + $0x8] sm:$0xff]
  %v32 = vld [vmem:[%s0 + $0x10] sm:$0xff]
  %v33 = vld [vmem:[%s1] sm:$0xff]
  %vm34 = vcmask 261120
  %v36 = vsel %vm34, %v33, 0
  %38 = vmatprep.subr.mxu0 0.0
  %39 = vmatpush1.msra.mxu0 %v17
  %40 = vmatprep.subr.mxu0 0.0
  %41 = vmatpush1.msra.mxu0 %v18
  %42 = vmatprep.subr.mxu0 0.0
  %43 = vmatpush1.msra.mxu0 %v19
  %44 = vmatprep.subr.mxu0 0.0
  %45 = vmatpush1.msra.mxu0 %v20
  %46 = vmatprep.subr.mxu0 0.0
  %47 = vmatpush1.msra.mxu0 0.0
  %48 = vmatprep.subr.mxu0 0.0
  %49 = vmatpush1.msra.mxu0 0.0
  %50 = vmatprep.subr.mxu0 0.0
  %51 = vmatpush1.msra.mxu0 0.0
  %52 = vmatprep.subr.mxu0 0.0
  %53 = vmatpush1.msra.mxu0 0.0
  %54 = vmatprep.subr.mxu0 0.0
  %55 = vmatpush1.msra.mxu0 0.0
  %56 = vmatprep.subr.mxu0 0.0
  %57 = vmatpush1.msra.mxu0 0.0
  %58 = vmatprep.subr.mxu0 0.0
  %59 = vmatpush1.msra.mxu0 0.0
  %60 = vmatprep.subr.mxu0 0.0
  %61 = vmatpush1.msra.mxu0 0.0
  %62 = vmatprep.subr.mxu0 0.0
  %63 = vmatpush1.msra.mxu0 0.0
  %64 = vmatprep.subr.mxu0 0.0
  %65 = vmatpush1.msra.mxu0 0.0
  %66 = vmatprep.subr.mxu0 0.0
  %67 = vmatpush1.msra.mxu0 0.0
  %68 = vmatprep.subr.mxu0 0.0
  %69 = vmatpush1.msra.mxu0 0.0
  %70 = vmatprep.subr.mxu0 0.0
  %71 = vmatpush1.msra.mxu0 0.0
  %72 = vmatprep.subr.mxu0 0.0
  %73 = vmatpush1.msra.mxu0 0.0
  %74 = vmatprep.subr.mxu0 0.0
  %75 = vmatpush1.msra.mxu0 0.0
  %76 = vmatprep.subr.mxu0 0.0
  %77 = vmatpush1.msra.mxu0 0.0
  %78 = vmatprep.subr.mxu0 0.0
  %79 = vmatpush1.msra.mxu0 0.0
  %80 = vmatprep.subr.mxu0 0.0
  %81 = vmatpush1.msra.mxu0 0.0
  %82 = vmatprep.subr.mxu0 0.0
  %83 = vmatpush1.msra.mxu0 0.0
  %84 = vmatprep.subr.mxu0 0.0
  %85 = vmatpush1.msra.mxu0 0.0
  %86 = vmatprep.subr.mxu0 0.0
  %87 = vmatpush1.msra.mxu0 0.0
  %88 = vmatprep.subr.mxu0 0.0
  %89 = vmatpush1.msra.mxu0 0.0
  %90 = vmatprep.subr.mxu0 0.0
  %91 = vmatpush1.msra.mxu0 0.0
  %92 = vmatprep.subr.mxu0 0.0
  %93 = vmatpush1.msra.mxu0 0.0
  %94 = vmatprep.subr.mxu0 0.0
  %95 = vmatpush1.msra.mxu0 0.0
  %96 = vmatprep.subr.mxu0 0.0
  %97 = vmatpush1.msra.mxu0 0.0
  %98 = vmatprep.subr.mxu0 0.0
  %99 = vmatpush1.msra.mxu0 0.0
  %100 = vmatprep.subr.mxu0 0.0
  %101 = vmatpush1.msra.mxu0 0.0
  %102 = vmatprep.mubr.f32.mxu0 0.0
  %103 = vmatmul.mubr.f32.gmra.mrb[0].mxu0 %v36
  %v104 = vpop.f32.mrb[0].mxu0
  %v105 = vadd.f32 0.0, %v104
  %v106 = vpop.f32.mrb[0].mxu0
  %107 = vdwg.mxu0
  %v108 = vlaneseq
  %v109 = vshrl.u32 %v108, 7
  %v110 = vsub.s32 0, %v109
  %v111 = vrot.slane %v29, %v110
  %vm112 = vcmask 195584
  %v114 = vsel %vm112, %v30, 0
  %v117 = vsel %vm112, %v31, 0
  %v120 = vsel %vm112, %v32, 0
  %122 = vmatprep.subr.mxu0 0.0
  %123 = vmatpush1.msra.mxu0 %v105
  %124 = vmatprep.subr.mxu0 0.0
  %125 = vmatpush1.msra.mxu0 %v105
  %126 = vmatprep.subr.mxu0 0.0
  %127 = vmatpush1.msra.mxu0 %v105
  %128 = vmatprep.subr.mxu0 0.0
  %129 = vmatpush1.msra.mxu0 0.0
  %130 = vmatprep.subr.mxu0 0.0
  %131 = vmatpush1.msra.mxu0 0.0
  %132 = vmatprep.subr.mxu0 0.0
  %133 = vmatpush1.msra.mxu0 0.0
  %134 = vmatprep.subr.mxu0 0.0
  %135 = vmatpush1.msra.mxu0 0.0
  %136 = vmatprep.subr.mxu0 0.0
  %137 = vmatpush1.msra.mxu0 0.0
  %138 = vmatprep.subr.mxu0 0.0
  %139 = vmatpush1.msra.mxu0 0.0
  %140 = vmatprep.subr.mxu0 0.0
  %141 = vmatpush1.msra.mxu0 0.0
  %142 = vmatprep.subr.mxu0 0.0
  %143 = vmatpush1.msra.mxu0 0.0
  %144 = vmatprep.subr.mxu0 0.0
  %145 = vmatpush1.msra.mxu0 0.0
  %146 = vmatprep.subr.mxu0 0.0
  %147 = vmatpush1.msra.mxu0 0.0
  %148 = vmatprep.subr.mxu0 0.0
  %149 = vmatpush1.msra.mxu0 0.0
  %150 = vmatprep.subr.mxu0 0.0
  %151 = vmatpush1.msra.mxu0 0.0
  %152 = vmatprep.subr.mxu0 0.0
  %153 = vmatpush1.msra.mxu0 0.0
  %154 = vmatprep.subr.mxu0 0.0
  %155 = vmatpush1.msra.mxu0 0.0
  %156 = vmatprep.subr.mxu0 0.0
  %157 = vmatpush1.msra.mxu0 0.0
  %158 = vmatprep.subr.mxu0 0.0
  %159 = vmatpush1.msra.mxu0 0.0
  %160 = vmatprep.subr.mxu0 0.0
  %161 = vmatpush1.msra.mxu0 0.0
  %162 = vmatprep.subr.mxu0 0.0
  %163 = vmatpush1.msra.mxu0 0.0
  %164 = vmatprep.subr.mxu0 0.0
  %165 = vmatpush1.msra.mxu0 0.0
  %166 = vmatprep.subr.mxu0 0.0
  %167 = vmatpush1.msra.mxu0 0.0
  %168 = vmatprep.subr.mxu0 0.0
  %169 = vmatpush1.msra.mxu0 0.0
  %170 = vmatprep.subr.mxu0 0.0
  %171 = vmatpush1.msra.mxu0 0.0
  %172 = vmatprep.subr.mxu0 0.0
  %173 = vmatpush1.msra.mxu0 0.0
  %174 = vmatprep.subr.mxu0 0.0
  %175 = vmatpush1.msra.mxu0 0.0
  %176 = vmatprep.subr.mxu0 0.0
  %177 = vmatpush1.msra.mxu0 0.0
  %178 = vmatprep.subr.mxu0 0.0
  %179 = vmatpush1.msra.mxu0 0.0
  %180 = vmatprep.subr.mxu0 0.0
  %181 = vmatpush1.msra.mxu0 0.0
  %182 = vmatprep.subr.mxu0 0.0
  %183 = vmatpush1.msra.mxu0 0.0
  %184 = vmatprep.subr.mxu0 0.0
  %185 = vmatpush1.msra.mxu0 0.0
  %186 = vmatprep.mubr.f32.mxu0 0.0
  %187 = vmatmul.mubr.f32.gmra.mrb[0].mxu0 %v114
  %v188 = vpop.f32.mrb[0].mxu0
  %v189 = vadd.f32 %v111, %v188
  %v190 = vpop.f32.mrb[0].mxu0
  %191 = vmatprep.mubr.f32.mxu0 0.0
  %192 = vmatmul.mubr.f32.gmra.mrb[0].mxu0 %v117
  %v193 = vpop.f32.mrb[0].mxu0
  %v194 = vadd.f32 %v111, %v193
  %v195 = vpop.f32.mrb[0].mxu0
  %196 = vmatprep.mubr.f32.mxu0 0.0
  %197 = vmatmul.mubr.f32.gmra.mrb[0].mxu0 %v120
  %v198 = vpop.f32.mrb[0].mxu0
  %v199 = vadd.f32 %v111, %v198
  %v200 = vpop.f32.mrb[0].mxu0
  %201 = vdwg.mxu0
  %v202 = vmax.f32 %v189, 0.0
  %v203 = vmax.f32 %v194, 0.0
  %v204 = vmax.f32 %v199, 0.0
  %v206 = vsel %vm34, %v202, 0
  %v209 = vsel %vm34, %v203, 0
  %v212 = vsel %vm34, %v204, 0
  %214 = vmatprep.subr.mxu0 0.0
  %215 = vmatpush1.msra.mxu0 %v21
  %216 = vmatprep.subr.mxu0 0.0
  %217 = vmatpush1.msra.mxu0 %v22
  %218 = vmatprep.subr.mxu0 0.0
  %219 = vmatpush1.msra.mxu0 %v23
  %220 = vmatprep.subr.mxu0 0.0
  %221 = vmatpush1.msra.mxu0 %v24
  %222 = vmatprep.subr.mxu0 0.0
  %223 = vmatpush1.msra.mxu0 0.0
  %224 = vmatprep.subr.mxu0 0.0
  %225 = vmatpush1.msra.mxu0 0.0
  %226 = vmatprep.subr.mxu0 0.0
  %227 = vmatpush1.msra.mxu0 0.0
  %228 = vmatprep.subr.mxu0 0.0
  %229 = vmatpush1.msra.mxu0 0.0
  %230 = vmatprep.subr.mxu0 0.0
  %231 = vmatpush1.msra.mxu0 0.0
  %232 = vmatprep.subr.mxu0 0.0
  %233 = vmatpush1.msra.mxu0 0.0
  %234 = vmatprep.subr.mxu0 0.0
  %235 = vmatpush1.msra.mxu0 0.0
  %236 = vmatprep.subr.mxu0 0.0
  %237 = vmatpush1.msra.mxu0 0.0
  %238 = vmatprep.subr.mxu0 0.0
  %239 = vmatpush1.msra.mxu0 0.0
  %240 = vmatprep.subr.mxu0 0.0
  %241 = vmatpush1.msra.mxu0 0.0
  %242 = vmatprep.subr.mxu0 0.0
  %243 = vmatpush1.msra.mxu0 0.0
  %244 = vmatprep.subr.mxu0 0.0
  %245 = vmatpush1.msra.mxu0 0.0
  %246 = vmatprep.subr.mxu0 0.0
  %247 = vmatpush1.msra.mxu0 0.0
  %248 = vmatprep.subr.mxu0 0.0
  %249 = vmatpush1.msra.mxu0 0.0
  %250 = vmatprep.subr.mxu0 0.0
  %251 = vmatpush1.msra.mxu0 0.0
  %252 = vmatprep.subr.mxu0 0.0
  %253 = vmatpush1.msra.mxu0 0.0
  %254 = vmatprep.subr.mxu0 0.0
  %255 = vmatpush1.msra.mxu0 0.0
  %256 = vmatprep.subr.mxu0 0.0
  %257 = vmatpush1.msra.mxu0 0.0
  %258 = vmatprep.subr.mxu0 0.0
  %259 = vmatpush1.msra.mxu0 0.0
  %260 = vmatprep.subr.mxu0 0.0
  %261 = vmatpush1.msra.mxu0 0.0
  %262 = vmatprep.subr.mxu0 0.0
  %263 = vmatpush1.msra.mxu0 0.0
  %264 = vmatprep.subr.mxu0 0.0
  %265 = vmatpush1.msra.mxu0 0.0
  %266 = vmatprep.subr.mxu0 0.0
  %267 = vmatpush1.msra.mxu0 0.0
  %268 = vmatprep.subr.mxu0 0.0
  %269 = vmatpush1.msra.mxu0 0.0
  %270 = vmatprep.subr.mxu0 0.0
  %271 = vmatpush1.msra.mxu0 0.0
  %272 = vmatprep.subr.mxu0 0.0
  %273 = vmatpush1.msra.mxu0 0.0
  %274 = vmatprep.subr.mxu0 0.0
  %275 = vmatpush1.msra.mxu0 0.0
  %276 = vmatprep.subr.mxu0 0.0
  %277 = vmatpush1.msra.mxu0 0.0
  %278 = vmatprep.mubr.f32.mxu0 0.0
  %279 = vmatmul.mubr.f32.gmra.mrb[0].mxu0 %v206
  %v280 = vpop.f32.mrb[0].mxu0
  %v281 = vadd.f32 0.0, %v280
  %v282 = vpop.f32.mrb[0].mxu0
  %283 = vmatprep.mubr.f32.mxu0 0.0
  %284 = vmatmul.mubr.f32.gmra.mrb[0].mxu0 %v209
  %v285 = vpop.f32.mrb[0].mxu0
  %v286 = vadd.f32 0.0, %v285
  %v287 = vpop.f32.mrb[0].mxu0
  %288 = vmatprep.mubr.f32.mxu0 0.0
  %289 = vmatmul.mubr.f32.gmra.mrb[0].mxu0 %v212
  %v290 = vpop.f32.mrb[0].mxu0
  %v291 = vadd.f32 0.0, %v290
  %v292 = vpop.f32.mrb[0].mxu0
  %293 = vdwg.mxu0
  %v294 = vlaneseq
  %v295 = vshrl.u32 %v294, 7
  %v296 = vsub.s32 1, %v295
  %v297 = vrot.slane %v29, %v296
  %298 = vmatprep.subr.mxu0 0.0
  %299 = vmatpush1.msra.mxu0 %v281
  %300 = vmatprep.subr.mxu0 0.0
  %301 = vmatpush1.msra.mxu0 %v286
  %302 = vmatprep.subr.mxu0 0.0
  %303 = vmatpush1.msra.mxu0 %v291
  %304 = vmatprep.subr.mxu0 0.0
  %305 = vmatpush1.msra.mxu0 0.0
  %306 = vmatprep.subr.mxu0 0.0
  %307 = vmatpush1.msra.mxu0 0.0
  %308 = vmatprep.subr.mxu0 0.0
  %309 = vmatpush1.msra.mxu0 0.0
  %310 = vmatprep.subr.mxu0 0.0
  %311 = vmatpush1.msra.mxu0 0.0
  %312 = vmatprep.subr.mxu0 0.0
  %313 = vmatpush1.msra.mxu0 0.0
  %314 = vmatprep.subr.mxu0 0.0
  %315 = vmatpush1.msra.mxu0 0.0
  %316 = vmatprep.subr.mxu0 0.0
  %317 = vmatpush1.msra.mxu0 0.0
  %318 = vmatprep.subr.mxu0 0.0
  %319 = vmatpush1.msra.mxu0 0.0
  %320 = vmatprep.subr.mxu0 0.0
  %321 = vmatpush1.msra.mxu0 0.0
  %322 = vmatprep.subr.mxu0 0.0
  %323 = vmatpush1.msra.mxu0 0.0
  %324 = vmatprep.subr.mxu0 0.0
  %325 = vmatpush1.msra.mxu0 0.0
  %326 = vmatprep.subr.mxu0 0.0
  %327 = vmatpush1.msra.mxu0 0.0
  %328 = vmatprep.subr.mxu0 0.0
  %329 = vmatpush1.msra.mxu0 0.0
  %330 = vmatprep.subr.mxu0 0.0
  %331 = vmatpush1.msra.mxu0 0.0
  %332 = vmatprep.subr.mxu0 0.0
  %333 = vmatpush1.msra.mxu0 0.0
  %334 = vmatprep.subr.mxu0 0.0
  %335 = vmatpush1.msra.mxu0 0.0
  %336 = vmatprep.subr.mxu0 0.0
  %337 = vmatpush1.msra.mxu0 0.0
  %338 = vmatprep.subr.mxu0 0.0
  %339 = vmatpush1.msra.mxu0 0.0
  %340 = vmatprep.subr.mxu0 0.0
  %341 = vmatpush1.msra.mxu0 0.0
  %342 = vmatprep.subr.mxu0 0.0
  %343 = vmatpush1.msra.mxu0 0.0
  %344 = vmatprep.subr.mxu0 0.0
  %345 = vmatpush1.msra.mxu0 0.0
  %346 = vmatprep.subr.mxu0 0.0
  %347 = vmatpush1.msra.mxu0 0.0
  %348 = vmatprep.subr.mxu0 0.0
  %349 = vmatpush1.msra.mxu0 0.0
  %350 = vmatprep.subr.mxu0 0.0
  %351 = vmatpush1.msra.mxu0 0.0
  %352 = vmatprep.subr.mxu0 0.0
  %353 = vmatpush1.msra.mxu0 0.0
  %354 = vmatprep.subr.mxu0 0.0
  %355 = vmatpush1.msra.mxu0 0.0
  %356 = vmatprep.subr.mxu0 0.0
  %357 = vmatpush1.msra.mxu0 0.0
  %358 = vmatprep.subr.mxu0 0.0
  %359 = vmatpush1.msra.mxu0 0.0
  %360 = vmatprep.subr.mxu0 0.0
  %361 = vmatpush1.msra.mxu0 0.0
  %362 = vmatprep.mubr.f32.mxu0 0.0
  %363 = vmatmul.mubr.f32.gmra.mrb[0].mxu0 %v114
  %v364 = vpop.f32.mrb[0].mxu0
  %v365 = vadd.f32 %v297, %v364
  %v366 = vpop.f32.mrb[0].mxu0
  %367 = vmatprep.mubr.f32.mxu0 0.0
  %368 = vmatmul.mubr.f32.gmra.mrb[0].mxu0 %v117
  %v369 = vpop.f32.mrb[0].mxu0
  %v370 = vadd.f32 %v297, %v369
  %v371 = vpop.f32.mrb[0].mxu0
  %372 = vmatprep.mubr.f32.mxu0 0.0
  %373 = vmatmul.mubr.f32.gmra.mrb[0].mxu0 %v120
  %v374 = vpop.f32.mrb[0].mxu0
  %v375 = vadd.f32 %v297, %v374
  %v376 = vpop.f32.mrb[0].mxu0
  %377 = vdwg.mxu0
  %v378 = vlaneseq
  %v379 = vshrl.u32 %v378, 7
  %v380 = vsub.s32 2, %v379
  %v381 = vrot.slane %v29, %v380
  %v383 = vsel %vm34, %v365, 0
  %385 = vmatprep.subr.mxu0 0.0
  %386 = vmatpush1.msra.mxu0 %v25
  %387 = vmatprep.subr.mxu0 0.0
  %388 = vmatpush1.msra.mxu0 %v26
  %389 = vmatprep.subr.mxu0 0.0
  %390 = vmatpush1.msra.mxu0 %v27
  %391 = vmatprep.subr.mxu0 0.0
  %392 = vmatpush1.msra.mxu0 %v28
  %393 = vmatprep.subr.mxu0 0.0
  %394 = vmatpush1.msra.mxu0 0.0
  %395 = vmatprep.subr.mxu0 0.0
  %396 = vmatpush1.msra.mxu0 0.0
  %397 = vmatprep.subr.mxu0 0.0
  %398 = vmatpush1.msra.mxu0 0.0
  %399 = vmatprep.subr.mxu0 0.0
  %400 = vmatpush1.msra.mxu0 0.0
  %401 = vmatprep.subr.mxu0 0.0
  %402 = vmatpush1.msra.mxu0 0.0
  %403 = vmatprep.subr.mxu0 0.0
  %404 = vmatpush1.msra.mxu0 0.0
  %405 = vmatprep.subr.mxu0 0.0
  %406 = vmatpush1.msra.mxu0 0.0
  %407 = vmatprep.subr.mxu0 0.0
  %408 = vmatpush1.msra.mxu0 0.0
  %409 = vmatprep.subr.mxu0 0.0
  %410 = vmatpush1.msra.mxu0 0.0
  %411 = vmatprep.subr.mxu0 0.0
  %412 = vmatpush1.msra.mxu0 0.0
  %413 = vmatprep.subr.mxu0 0.0
  %414 = vmatpush1.msra.mxu0 0.0
  %415 = vmatprep.subr.mxu0 0.0
  %416 = vmatpush1.msra.mxu0 0.0
  %417 = vmatprep.subr.mxu0 0.0
  %418 = vmatpush1.msra.mxu0 0.0
  %419 = vmatprep.subr.mxu0 0.0
  %420 = vmatpush1.msra.mxu0 0.0
  %421 = vmatprep.subr.mxu0 0.0
  %422 = vmatpush1.msra.mxu0 0.0
  %423 = vmatprep.subr.mxu0 0.0
  %424 = vmatpush1.msra.mxu0 0.0
  %425 = vmatprep.subr.mxu0 0.0
  %426 = vmatpush1.msra.mxu0 0.0
  %427 = vmatprep.subr.mxu0 0.0
  %428 = vmatpush1.msra.mxu0 0.0
  %429 = vmatprep.subr.mxu0 0.0
  %430 = vmatpush1.msra.mxu0 0.0
  %431 = vmatprep.subr.mxu0 0.0
  %432 = vmatpush1.msra.mxu0 0.0
  %433 = vmatprep.subr.mxu0 0.0
  %434 = vmatpush1.msra.mxu0 0.0
  %435 = vmatprep.subr.mxu0 0.0
  %436 = vmatpush1.msra.mxu0 0.0
  %437 = vmatprep.subr.mxu0 0.0
  %438 = vmatpush1.msra.mxu0 0.0
  %439 = vmatprep.subr.mxu0 0.0
  %440 = vmatpush1.msra.mxu0 0.0
  %441 = vmatprep.subr.mxu0 0.0
  %442 = vmatpush1.msra.mxu0 0.0
  %443 = vmatprep.subr.mxu0 0.0
  %444 = vmatpush1.msra.mxu0 0.0
  %445 = vmatprep.subr.mxu0 0.0
  %446 = vmatpush1.msra.mxu0 0.0
  %447 = vmatprep.subr.mxu0 0.0
  %448 = vmatpush1.msra.mxu0 0.0
  %449 = vmatprep.mubr.f32.mxu0 0.0
  %450 = vmatmul.mubr.f32.gmra.mrb[0].mxu0 %v383
  %v451 = vpop.f32.mrb[0].mxu0
  %v452 = vadd.f32 %v381, %v451
  %v453 = vpop.f32.mrb[0].mxu0
  %454 = vdwg.mxu0
  %vm455 = vcmp.gt.f32.partialorder %v452, 0.0
  %v456 = vmin.f32 %v452, 0.0
  %v457 = vmul.f32 %v456, 1.442695
  %v458 = vpow.pop %v457
  %v459 = vsub.f32 %v458, 1.0
  %v460 = vsel %vm455, %v452, %v459
  %462 = vrot.lane.b32.xlu0 %v370, 32
  %v463 = vpop.permute.xlu0 %462
  %466 = vrot.lane.b32.xlu0 %v375, 64
  %v467 = vpop.permute.xlu0 %466
  %470 = vrot.lane.b32.xlu0 %v460, 96
  %v471 = vpop.permute.xlu0 %470
  %v473 = vsel %vm34, %v365, %v463
  %vm474 = vcmask 523264
  %v475 = vsel %vm474, %v473, %v467
  %vm476 = vcmask 785408
  %v477 = vsel %vm476, %v475, %v471
  %478 = vst [vmem:[%s4] sm:$0xff] %v477
  // Predicated region
  $region18: #{_fused_forward_project.1} parent=0 // pred_check
    _
  $region19: #{_fused_forward_project.1} parent=0 // pred_check_branch
    %480 = sbr.rel (0) target = $region21
  $region20: #{_fused_forward_project.1} parent=0 // pred_region
    _
  $region21: #{_fused_forward_project.1} parent=0 // pred_fallthru
    _
  // Predicated region
  $region22: #{_fused_forward_project.1} parent=0 // pred_check
    _
  $region23: #{_fused_forward_project.1} parent=0 // pred_check_branch
    %482 = sbr.rel (0) target = $region25
  $region24: #{_fused_forward_project.1} parent=0 // pred_region
    _
  $region25: #{_fused_forward_project.1} parent=0 // pred_fallthru
    _

</llo_original>
